<compile_context>
chip_gen: v5e
topology: v5e:2x2
jax: 0.10.0
libtpu: 0.0.40
codegen_flags: <defaults>
</compile_context>

<pallas_src>
import functools

import jax
import jax.numpy as jnp
from jax.experimental import pallas as pl
from jax.experimental.pallas import tpu as pltpu


def _round_up(x, m):
    return (x + m - 1) // m * m


# ---------------------------------------------------------------------------
# Kernel
# ---------------------------------------------------------------------------
def cnn_kernel(L, TB, E_pad, H_pad, O_pad, filter_sizes,
               emb_ref, w_all_ref, b_all_ref, fcw_ref, fcb_ref, out_ref):
    """One batch tile: fused tap matmul + shift/add + ReLU + mean-pool + fc."""
    n_taps = sum(filter_sizes)

    # One lane-dense MXU matmul for ALL conv taps of ALL filters.
    emb2 = emb_ref[...].reshape(L * TB, E_pad)                    # bf16
    taps = jnp.dot(emb2, w_all_ref[...],
                   preferred_element_type=jnp.float32)            # (L*TB, T*H_pad) f32
    taps = taps.reshape(L, TB, n_taps * H_pad)

    out_acc = jnp.zeros((TB, O_pad), jnp.float32)
    tap = 0
    for fi, fs in enumerate(filter_sizes):
        L_out = L - fs + 1
        # Shift-add over taps. Sequence axis is the leading (non-vreg) axis, so
        # these static slices are address offsets only; lane slices are
        # 128-aligned because H_pad is a lane multiple.
        acc = taps[0:L_out, :, tap * H_pad:(tap + 1) * H_pad]
        for k in range(1, fs):
            acc = acc + taps[k:k + L_out, :,
                             (tap + k) * H_pad:(tap + k + 1) * H_pad]
        tap += fs

        bias = b_all_ref[:, fi * H_pad:(fi + 1) * H_pad]          # (1, H_pad) f32
        conv = jnp.maximum(acc + bias[None, :, :], 0.0)           # (L_out, TB, H_pad)
        pooled = jnp.sum(conv, axis=0) * (1.0 / L_out)            # (TB, H_pad)

        # Per-branch fc accumulation -- mathematically identical to
        # concat(pooled) @ fc_w, but no lane-axis concatenation.
        out_acc = out_acc + jnp.dot(pooled.astype(jnp.bfloat16), fcw_ref[fi],
                                    preferred_element_type=jnp.float32)

    # dropout == identity at inference
    out_ref[...] = out_acc + fcb_ref[...]


# ---------------------------------------------------------------------------
# Wrapper
# ---------------------------------------------------------------------------
def prepare_params(params, filter_sizes=(1, 2, 3)):
    """Convert logical (PyTorch-layout) params into padded, fused, bf16 kernel params."""
    V, E = params["embedding"].shape
    H = params["conv_w"][0].shape[2]
    O = params["fc_w"].shape[1]
    E_pad, H_pad, O_pad = _round_up(E, 128), _round_up(H, 128), _round_up(O, 128)
    n_f = len(filter_sizes)
    n_taps = sum(filter_sizes)

    emb_table = jnp.zeros((V, E_pad), jnp.bfloat16)
    emb_table = emb_table.at[:, :E].set(params["embedding"].astype(jnp.bfloat16))

    # Fused per-tap conv weights: column blocks of 128 lanes per tap.
    w_all = jnp.zeros((E_pad, n_taps * H_pad), jnp.bfloat16)
    col = 0
    for fi, fs in enumerate(filter_sizes):
        w = params["conv_w"][fi]                     # (fs, E, H)
        for k in range(fs):
            w_all = w_all.at[:E, col * H_pad:col * H_pad + H].set(
                w[k].astype(jnp.bfloat16))
            col += 1

    b_all = jnp.zeros((1, n_f * H_pad), jnp.float32)
    for fi in range(n_f):
        b_all = b_all.at[:, fi * H_pad:fi * H_pad + H].set(params["conv_b"][fi])

    # fc weight pre-split per branch: (n_f, H_pad, O_pad), zero-padded rows/cols.
    fcw = jnp.zeros((n_f, H_pad, O_pad), jnp.bfloat16)
    for fi in range(n_f):
        fcw = fcw.at[fi, :H, :O].set(
            params["fc_w"][fi * H:(fi + 1) * H].astype(jnp.bfloat16))
    fcb = jnp.zeros((1, O_pad), jnp.float32)
    fcb = fcb.at[:, :O].set(params["fc_b"])

    return {"emb_table": emb_table, "w_all": w_all, "b_all": b_all,
            "fcw": fcw, "fcb": fcb, "dims": (E, H, O, E_pad, H_pad, O_pad),
            "n_filters": n_f, "n_taps": n_taps}


def cnn_forward(text, kp, filter_sizes=(1, 2, 3)):
    """Embedding gather (wrapper) + one batch-gridded pallas_call."""
    L, B = text.shape
    E, H, O, E_pad, H_pad, O_pad = kp["dims"]
    n_f, n_taps = kp["n_filters"], kp["n_taps"]

    # Gather directly in (L, B, E_pad) -- the kernel's native layout. No
    # full-activation transpose is materialized.
    emb = jnp.take(kp["emb_table"], text, axis=0)                 # (L, B, E_pad) bf16

    # VMEM-aware batch tile: keep the f32 tap buffer per tile small (<= ~8 MiB)
    # so 2-deep pipelining survives even v7x's 64 MiB VMEM; cap at 128 rows.
    B_pad = _round_up(B, 8)
    tap_bytes_per_row = L * n_taps * H_pad * 4
    TB = max(8, min(128, ((8 * 1024 * 1024) // max(tap_bytes_per_row, 1)) // 8 * 8))
    TB = min(TB, B_pad)
    B_pad = _round_up(B_pad, TB)
    if B_pad != B:
        emb = jnp.pad(emb, ((0, 0), (0, B_pad - B), (0, 0)))

    grid = (B_pad // TB,)
    kernel = functools.partial(cnn_kernel, L, TB, E_pad, H_pad, O_pad,
                               tuple(filter_sizes))

    out = pl.pallas_call(
        kernel,
        out_shape=jax.ShapeDtypeStruct((B_pad, O_pad), jnp.float32),
        grid=grid,
        in_specs=[
            pl.BlockSpec((L, TB, E_pad), lambda i: (0, i, 0)),          # emb tile
            pl.BlockSpec((E_pad, n_taps * H_pad), lambda i: (0, 0)),    # fused conv W
            pl.BlockSpec((1, n_f * H_pad), lambda i: (0, 0)),           # conv biases
            pl.BlockSpec((n_f, H_pad, O_pad), lambda i: (0, 0, 0)),     # fc W (per branch)
            pl.BlockSpec((1, O_pad), lambda i: (0, 0)),                 # fc bias
        ],
        out_specs=pl.BlockSpec((TB, O_pad), lambda i: (i, 0)),
        compiler_params=pltpu.CompilerParams(
            dimension_semantics=("parallel",)),
    )(emb, kp["w_all"], kp["b_all"], kp["fcw"], kp["fcb"])

    return out[:B, :O]


# ---------------------------------------------------------------------------
# Pure-JAX reference (same mixed-precision math, different lowering path)
# ---------------------------------------------------------------------------
def ref_forward(text, params, filter_sizes=(1, 2, 3)):
    emb = jnp.transpose(jnp.take(params["embedding"], text, axis=0),
                        (1, 0, 2)).astype(jnp.bfloat16)          # (B, L, E)
    L = emb.shape[1]
    pooled = []
    for fs, w, b in zip(filter_sizes, params["conv_w"], params["conv_b"]):
        L_out = L - fs + 1
        conv = b[None, :, :] + sum(
            jnp.einsum("ble,eh->blh", emb[:, k:k + L_out, :],
                       w[k].astype(jnp.bfloat16),
                       preferred_element_type=jnp.float32)
            for k in range(fs))
        conv = jnp.maximum(conv, 0.0)
        pooled.append(jnp.mean(conv, axis=1))
    cat = jnp.concatenate(pooled, axis=-1).astype(jnp.bfloat16)
    return (jnp.dot(cat, params["fc_w"].astype(jnp.bfloat16),
                    preferred_element_type=jnp.float32)
            + params["fc_b"])


# ---------------------------------------------------------------------------
# Logical (PyTorch-layout) parameter init
# ---------------------------------------------------------------------------
def init_params(key, vocab, emb_dim, hidden_dim, out_dim, filter_sizes=(1, 2, 3)):
    n_fs = len(filter_sizes)
    keys = jax.random.split(key, 3 + 2 * n_fs)
    params = {
        "embedding": jax.random.normal(keys[0], (vocab, emb_dim), jnp.float32),
        "conv_w": [],
        "conv_b": [],
        # fc weight stored pre-transposed: (3H, O) so forward does cat @ W
        "fc_w": 0.05 * jax.random.normal(keys[1], (hidden_dim * n_fs, out_dim),
                                         jnp.float32),
        "fc_b": 0.01 * jax.random.normal(keys[2], (1, out_dim), jnp.float32),
    }
    for i, fs in enumerate(filter_sizes):
        kw = keys[3 + 2 * i]
        kb = keys[4 + 2 * i]
        # stored per-tap (fs, E, H) == PyTorch Conv1d weight (H, E, fs) transposed
        params["conv_w"].append(
            0.1 * jax.random.normal(kw, (fs, emb_dim, hidden_dim), jnp.float32))
        params["conv_b"].append(
            0.01 * jax.random.normal(kb, (1, hidden_dim), jnp.float32))
    return params


if __name__ == "__main__":
    VOCAB, EMB, HID, OUT = 50, 32, 32, 4
    SEQ, BATCH = 8, 2
    FILTER_SIZES = (1, 2, 3)

    root = jax.random.PRNGKey(0)
    k_params, k_text = jax.random.split(root)
    params = init_params(k_params, VOCAB, EMB, HID, OUT, FILTER_SIZES)
    text = jax.random.randint(k_text, (SEQ, BATCH), 0, VOCAB, dtype=jnp.int32)

    kparams = prepare_params(params, FILTER_SIZES)
    out = cnn_forward(text, kparams, FILTER_SIZES)
    out = jax.block_until_ready(out)

    ref = jax.block_until_ready(ref_forward(text, params, FILTER_SIZES))
    assert out.shape == (BATCH, OUT), out.shape
    assert jnp.allclose(out, ref, atol=1e-2, rtol=1e-2), (out, ref)

    print("KERNEL_OK")
</pallas_src>

<mosaic_0001>
module attributes {stable_mosaic.version = 11 : i64} {
  func.func @cnn_kernel(%arg0: i32, %arg1: memref<8x8x128xbf16, #tpu.memory_space<vmem>>, %arg2: memref<128x768xbf16, #tpu.memory_space<vmem>>, %arg3: memref<1x384xf32, #tpu.memory_space<vmem>>, %arg4: memref<3x128x128xbf16, #tpu.memory_space<vmem>>, %arg5: memref<1x128xf32, #tpu.memory_space<vmem>>, %arg6: memref<8x128xf32, #tpu.memory_space<vmem>>) attributes {dimension_semantics = [#tpu.dimension_semantics<parallel>], iteration_bounds = array<i64: 1>, scalar_prefetch = 0 : i64, scratch_operands = 0 : i64, tpu.core_type = #tpu.core_type<tc>, window_params = [{transform_indices = @transform_0, window_bounds = array<i64: 8, 8, 128>}, {pipeline_mode = #tpu.pipeline_mode<synchronous>, transform_indices = @transform_1, window_bounds = array<i64: 128, 768>}, {pipeline_mode = #tpu.pipeline_mode<synchronous>, transform_indices = @transform_2, window_bounds = array<i64: 1, 384>}, {pipeline_mode = #tpu.pipeline_mode<synchronous>, transform_indices = @transform_3, window_bounds = array<i64: 3, 128, 128>}, {pipeline_mode = #tpu.pipeline_mode<synchronous>, transform_indices = @transform_4, window_bounds = array<i64: 1, 128>}, {transform_indices = @transform_5, window_bounds = array<i64: 8, 128>}]} {
    %c0 = arith.constant 0 : index
    %c0_0 = arith.constant 0 : index
    %c0_1 = arith.constant 0 : index
    %0 = vector.load %arg1[%c0, %c0_0, %c0_1] : memref<8x8x128xbf16, #tpu.memory_space<vmem>>, vector<8x8x128xbf16>
    %1 = vector.shape_cast %0 : vector<8x8x128xbf16> to vector<64x128xbf16>
    %c0_2 = arith.constant 0 : index
    %c0_3 = arith.constant 0 : index
    %2 = vector.load %arg2[%c0_2, %c0_3] : memref<128x768xbf16, #tpu.memory_space<vmem>>, vector<128x768xbf16>
    %cst = arith.constant dense<0.000000e+00> : vector<64x768xf32>
    %3 = tpu.matmul %1, %2, %cst {dimension_numbers = #tpu.dot_dimension_numbers<[1], [0], [0], [1], [0, 0, 1, 1], [], []>} : vector<64x128xbf16>, vector<128x768xbf16>, vector<64x768xf32> -> vector<64x768xf32>
    %4 = vector.shape_cast %3 : vector<64x768xf32> to vector<8x8x768xf32>
    %cst_4 = arith.constant 0.000000e+00 : f32
    %5 = vector.broadcast %cst_4 : f32 to vector<8x128xf32>
    %6 = vector.extract_strided_slice %4 {offsets = [0, 0, 0], sizes = [8, 8, 128], strides = [1, 1, 1]} : vector<8x8x768xf32> to vector<8x8x128xf32>
    %c0_5 = arith.constant 0 : index
    %c0_6 = arith.constant 0 : index
    %7 = vector.load %arg3[%c0_5, %c0_6] : memref<1x384xf32, #tpu.memory_space<vmem>>, vector<1x128xf32>
    %8 = vector.shape_cast %7 : vector<1x128xf32> to vector<1x1x128xf32>
    %9 = vector.broadcast %8 : vector<1x1x128xf32> to vector<8x8x128xf32>
    %10 = arith.addf %6, %9 : vector<8x8x128xf32>
    %cst_7 = arith.constant 0.000000e+00 : f32
    %11 = vector.broadcast %cst_7 : f32 to vector<8x8x128xf32>
    %12 = arith.maximumf %10, %11 : vector<8x8x128xf32>
    %cst_8 = arith.constant dense<0.000000e+00> : vector<8x128xf32>
    %13 = vector.multi_reduction <add>, %12, %cst_8 [0] : vector<8x8x128xf32> to vector<8x128xf32>
    %cst_9 = arith.constant 1.250000e-01 : f32
    %14 = vector.broadcast %cst_9 : f32 to vector<8x128xf32>
    %15 = arith.mulf %13, %14 : vector<8x128xf32>
    %16 = arith.truncf %15 : vector<8x128xf32> to vector<8x128xbf16>
    %c0_10 = arith.constant 0 : index
    %c0_11 = arith.constant 0 : index
    %c0_12 = arith.constant 0 : index
    %17 = vector.load %arg4[%c0_10, %c0_11, %c0_12] : memref<3x128x128xbf16, #tpu.memory_space<vmem>>, vector<1x128x128xbf16>
    %18 = vector.shape_cast %17 : vector<1x128x128xbf16> to vector<128x128xbf16>
    %cst_13 = arith.constant dense<0.000000e+00> : vector<8x128xf32>
    %19 = tpu.matmul %16, %18, %cst_13 {dimension_numbers = #tpu.dot_dimension_numbers<[1], [0], [0], [1], [0, 0, 1, 1], [], []>} : vector<8x128xbf16>, vector<128x128xbf16>, vector<8x128xf32> -> vector<8x128xf32>
    %20 = arith.addf %5, %19 : vector<8x128xf32>
    %21 = vector.extract_strided_slice %4 {offsets = [0, 0, 128], sizes = [7, 8, 128], strides = [1, 1, 1]} : vector<8x8x768xf32> to vector<7x8x128xf32>
    %22 = vector.extract_strided_slice %4 {offsets = [1, 0, 256], sizes = [7, 8, 128], strides = [1, 1, 1]} : vector<8x8x768xf32> to vector<7x8x128xf32>
    %23 = arith.addf %21, %22 : vector<7x8x128xf32>
    %c0_14 = arith.constant 0 : index
    %c128 = arith.constant 128 : index
    %24 = vector.load %arg3[%c0_14, %c128] : memref<1x384xf32, #tpu.memory_space<vmem>>, vector<1x128xf32>
    %25 = vector.shape_cast %24 : vector<1x128xf32> to vector<1x1x128xf32>
    %26 = vector.broadcast %25 : vector<1x1x128xf32> to vector<7x8x128xf32>
    %27 = arith.addf %23, %26 : vector<7x8x128xf32>
    %cst_15 = arith.constant 0.000000e+00 : f32
    %28 = vector.broadcast %cst_15 : f32 to vector<7x8x128xf32>
    %29 = arith.maximumf %27, %28 : vector<7x8x128xf32>
    %cst_16 = arith.constant dense<0.000000e+00> : vector<8x128xf32>
    %30 = vector.multi_reduction <add>, %29, %cst_16 [0] : vector<7x8x128xf32> to vector<8x128xf32>
    %cst_17 = arith.constant 0.142857149 : f32
    %31 = vector.broadcast %cst_17 : f32 to vector<8x128xf32>
    %32 = arith.mulf %30, %31 : vector<8x128xf32>
    %33 = arith.truncf %32 : vector<8x128xf32> to vector<8x128xbf16>
    %c1 = arith.constant 1 : index
    %c0_18 = arith.constant 0 : index
    %c0_19 = arith.constant 0 : index
    %34 = vector.load %arg4[%c1, %c0_18, %c0_19] : memref<3x128x128xbf16, #tpu.memory_space<vmem>>, vector<1x128x128xbf16>
    %35 = vector.shape_cast %34 : vector<1x128x128xbf16> to vector<128x128xbf16>
    %cst_20 = arith.constant dense<0.000000e+00> : vector<8x128xf32>
    %36 = tpu.matmul %33, %35, %cst_20 {dimension_numbers = #tpu.dot_dimension_numbers<[1], [0], [0], [1], [0, 0, 1, 1], [], []>} : vector<8x128xbf16>, vector<128x128xbf16>, vector<8x128xf32> -> vector<8x128xf32>
    %37 = arith.addf %20, %36 : vector<8x128xf32>
    %38 = vector.extract_strided_slice %4 {offsets = [0, 0, 384], sizes = [6, 8, 128], strides = [1, 1, 1]} : vector<8x8x768xf32> to vector<6x8x128xf32>
    %39 = vector.extract_strided_slice %4 {offsets = [1, 0, 512], sizes = [6, 8, 128], strides = [1, 1, 1]} : vector<8x8x768xf32> to vector<6x8x128xf32>
    %40 = arith.addf %38, %39 : vector<6x8x128xf32>
    %41 = vector.extract_strided_slice %4 {offsets = [2, 0, 640], sizes = [6, 8, 128], strides = [1, 1, 1]} : vector<8x8x768xf32> to vector<6x8x128xf32>
    %42 = arith.addf %40, %41 : vector<6x8x128xf32>
    %c0_21 = arith.constant 0 : index
    %c256 = arith.constant 256 : index
    %43 = vector.load %arg3[%c0_21, %c256] : memref<1x384xf32, #tpu.memory_space<vmem>>, vector<1x128xf32>
    %44 = vector.shape_cast %43 : vector<1x128xf32> to vector<1x1x128xf32>
    %45 = vector.broadcast %44 : vector<1x1x128xf32> to vector<6x8x128xf32>
    %46 = arith.addf %42, %45 : vector<6x8x128xf32>
    %cst_22 = arith.constant 0.000000e+00 : f32
    %47 = vector.broadcast %cst_22 : f32 to vector<6x8x128xf32>
    %48 = arith.maximumf %46, %47 : vector<6x8x128xf32>
    %cst_23 = arith.constant dense<0.000000e+00> : vector<8x128xf32>
    %49 = vector.multi_reduction <add>, %48, %cst_23 [0] : vector<6x8x128xf32> to vector<8x128xf32>
    %cst_24 = arith.constant 0.166666672 : f32
    %50 = vector.broadcast %cst_24 : f32 to vector<8x128xf32>
    %51 = arith.mulf %49, %50 : vector<8x128xf32>
    %52 = arith.truncf %51 : vector<8x128xf32> to vector<8x128xbf16>
    %c2 = arith.constant 2 : index
    %c0_25 = arith.constant 0 : index
    %c0_26 = arith.constant 0 : index
    %53 = vector.load %arg4[%c2, %c0_25, %c0_26] : memref<3x128x128xbf16, #tpu.memory_space<vmem>>, vector<1x128x128xbf16>
    %54 = vector.shape_cast %53 : vector<1x128x128xbf16> to vector<128x128xbf16>
    %cst_27 = arith.constant dense<0.000000e+00> : vector<8x128xf32>
    %55 = tpu.matmul %52, %54, %cst_27 {dimension_numbers = #tpu.dot_dimension_numbers<[1], [0], [0], [1], [0, 0, 1, 1], [], []>} : vector<8x128xbf16>, vector<128x128xbf16>, vector<8x128xf32> -> vector<8x128xf32>
    %56 = arith.addf %37, %55 : vector<8x128xf32>
    %c0_28 = arith.constant 0 : index
    %c0_29 = arith.constant 0 : index
    %57 = vector.load %arg5[%c0_28, %c0_29] : memref<1x128xf32, #tpu.memory_space<vmem>>, vector<1x128xf32>
    %58 = vector.broadcast %57 : vector<1x128xf32> to vector<8x128xf32>
    %59 = arith.addf %56, %58 : vector<8x128xf32>
    %c0_30 = arith.constant 0 : index
    %c0_31 = arith.constant 0 : index
    %60 = vector.load %arg6[%c0_30, %c0_31] : memref<8x128xf32, #tpu.memory_space<vmem>>, vector<8x128xf32>
    tpu.vector_store %arg6[%c0_30, %c0_31], %59 {strides = array<i32>} : memref<8x128xf32, #tpu.memory_space<vmem>>, vector<8x128xf32>,
    return
  }
  func.func @transform_0(%arg0: i32) -> (i32, i32, i32) {
    %c0_i32 = arith.constant 0 : i32
    %c0_i32_0 = arith.constant 0 : i32
    %c0_i32_1 = arith.constant 0 : i32
    return %c0_i32, %arg0, %c0_i32_0 : i32, i32, i32
  }
  func.func @transform_1(%arg0: i32) -> (i32, i32) {
    %c0_i32 = arith.constant 0 : i32
    %c0_i32_0 = arith.constant 0 : i32
    %c0_i32_1 = arith.constant 0 : i32
    return %c0_i32, %c0_i32_0 : i32, i32
  }
  func.func @transform_2(%arg0: i32) -> (i32, i32) {
    %c0_i32 = arith.constant 0 : i32
    %c0_i32_0 = arith.constant 0 : i32
    %c0_i32_1 = arith.constant 0 : i32
    return %c0_i32, %c0_i32_0 : i32, i32
  }
  func.func @transform_3(%arg0: i32) -> (i32, i32, i32) {
    %c0_i32 = arith.constant 0 : i32
    %c0_i32_0 = arith.constant 0 : i32
    %c0_i32_1 = arith.constant 0 : i32
    %c0_i32_2 = arith.constant 0 : i32
    return %c0_i32, %c0_i32_0, %c0_i32_1 : i32, i32, i32
  }
  func.func @transform_4(%arg0: i32) -> (i32, i32) {
    %c0_i32 = arith.constant 0 : i32
    %c0_i32_0 = arith.constant 0 : i32
    %c0_i32_1 = arith.constant 0 : i32
    return %c0_i32, %c0_i32_0 : i32, i32
  }
  func.func @transform_5(%arg0: i32) -> (i32, i32) {
    %c0_i32 = arith.constant 0 : i32
    %c0_i32_0 = arith.constant 0 : i32
    return %arg0, %c0_i32 : i32, i32
  }
}

</mosaic_0001>

<llo_original>
// kernel: tpu_custom_call.1
$region0: #{tpu_custom_call.1}
  #allocation0 [shape = 'u32[]', space=smem, size = 0x4, offset = 0x4, fixed_abs, tag = 'smem constant byte address 0x4 - core index']
  #allocation1 [shape = 'u32[72,128]{1,0:T(1,128)}', space=vmem, size = 0x9000, scoped, tag = 'internal scratch']
  %s0 = inlined_call_operand.hbm [shape: bf16[8,8,128], index: 0, kind: input, shape index: {}]
  %s1 = inlined_call_operand.hbm [shape: bf16[128,768], index: 1, kind: input, shape index: {}]
  %s2 = inlined_call_operand.hbm [shape: f32[1,384], index: 2, kind: input, shape index: {}]
  %s3 = inlined_call_operand.hbm [shape: bf16[3,128,128], index: 3, kind: input, shape index: {}]
  %s4 = inlined_call_operand.vmem [shape: f32[1,128], index: 4, kind: input, shape index: {}]
  %s5 = inlined_call_operand.hbm [shape: f32[8,128], index: 5, kind: output, shape index: {}]
  %s6 = sld [smem:[#allocation0]]
  $region46: #{tpu_custom_call.1} parent=0
    _
  %s8 = ssub.s32 1, %s6
  %s9 = scalar_select 0, %s8, %s6
  $region1: #{tpu_custom_call.1} parent=0
    #allocation2 [shape = 'u8[16384]{0}', space=vmem, size = 0x4000, scoped, tag = 'input window, operand 0, single buffered']
    #allocation3 [shape = 's32[1]{0}', space=sflag, size = 0x4, scoped, tag = 'scoped memory for tpu_custom_call.1']
    #allocation4 [shape = 's32[1]{0}', space=sflag, size = 0x4, scoped, tag = 'scoped memory for tpu_custom_call.1']
    #allocation5 [shape = 'u8[196608]{0}', space=vmem, size = 0x30000, scoped, tag = 'input window, operand 1, single buffered']
    #allocation6 [shape = 's32[1]{0}', space=sflag, size = 0x4, scoped, tag = 'scoped memory for tpu_custom_call.1']
    #allocation7 [shape = 'u8[1536]{0}', space=vmem, size = 0x800, scoped, tag = 'input window, operand 2, single buffered']
    #allocation8 [shape = 'u8[98304]{0}', space=vmem, size = 0x18000, scoped, tag = 'input window, operand 3, single buffered']
    #allocation9 [shape = 's32[1]{0}', space=sflag, size = 0x4, scoped, tag = 'scoped memory for tpu_custom_call.1']
    #allocation10 [shape = 'u8[4096]{0}', space=vmem, size = 0x1000, scoped, tag = 'output window, operand 0, single buffered']
    %10 = vsyncpa [#allocation3], 0
    %11 = vsyncpa [#allocation6], 0
    %12 = vsyncpa [#allocation9], 0
    %13 = vsyncpa [#allocation4], 0
    // Predicated region
    $region2: #{tpu_custom_call.1} parent=1 // pred_check
      _
    $region3: #{tpu_custom_call.1} parent=1 // pred_check_branch
      %15 = sbr.rel (0) target = $region5
    $region4: #{tpu_custom_call.1} parent=1 // pred_region
      %17 = vsyncadd [#allocation3], 0
      %s18 = sshll.u32 %s0, 4
      %s19 = int_to_ptr.hbm [resolvable:$true] %s18
      %s20 = sshll.u32 [#allocation2], 4
      %s21 = int_to_ptr.vmem [resolvable:$true] %s20
      %26 = dma.hbm_to_vmem [thread:$0]  %s19, 512, %s21, [#allocation3], 64, 64, 4
    $region5: #{tpu_custom_call.1} parent=1 // pred_fallthru
      _
    // Predicated region
    $region6: #{tpu_custom_call.1} parent=1 // pred_check
      _
    $region7: #{tpu_custom_call.1} parent=1 // pred_check_branch
      %28 = sbr.rel (0) target = $region9
    $region8: #{tpu_custom_call.1} parent=1 // pred_region
      %30 = vsyncadd [#allocation6], 0
      %s31 = sshll.u32 %s1, 4
      %s32 = int_to_ptr.hbm [resolvable:$true] %s31
      %s33 = sshll.u32 [#allocation5], 4
      %s34 = int_to_ptr.vmem [resolvable:$true] %s33
      %39 = dma.hbm_to_vmem [thread:$0]  %s32, 6144, %s34, [#allocation6], 384, 384, 24
    $region9: #{tpu_custom_call.1} parent=1 // pred_fallthru
      _
    // Predicated region
    $region10: #{tpu_custom_call.1} parent=1 // pred_check
      _
    $region11: #{tpu_custom_call.1} parent=1 // pred_check_branch
      %41 = sbr.rel (0) target = $region13
    $region12: #{tpu_custom_call.1} parent=1 // pred_region
      %43 = vsyncadd [#allocation6], 0
      %s45 = sshll.u32 %s2, 4
      %s46 = int_to_ptr.hbm [resolvable:$true] %s45
      %s47 = sshll.u32 [#allocation7], 4
      %s48 = int_to_ptr.vmem [resolvable:$true] %s47
      %50 = dma.hbm_to_vmem [thread:$0]  %s46, 48, %s48, [#allocation6]
    $region13: #{tpu_custom_call.1} parent=1 // pred_fallthru
      _
    // Predicated region
    $region14: #{tpu_custom_call.1} parent=1 // pred_check
      _
    $region15: #{tpu_custom_call.1} parent=1 // pred_check_branch
      %52 = sbr.rel (0) target = $region17
    $region16: #{tpu_custom_call.1} parent=1 // pred_region
      %54 = vsyncadd [#allocation9], 0
      %s55 = sshll.u32 %s3, 4
      %s56 = int_to_ptr.hbm [resolvable:$true] %s55
      %s57 = sshll.u32 [#allocation8], 4
      %s58 = int_to_ptr.vmem [resolvable:$true] %s57
      %63 = dma.hbm_to_vmem [thread:$0]  %s56, 3072, %s58, [#allocation9], 64, 64, 4
    $region17: #{tpu_custom_call.1} parent=1 // pred_fallthru
      _
    // Predicated region
    $region18: #{tpu_custom_call.1} parent=1 // pred_check
      _
    $region19: #{tpu_custom_call.1} parent=1 // pred_check_branch
      %65 = sbr.rel (0) target = $region21
    $region20: #{tpu_custom_call.1} parent=1 // pred_region
      _
    $region21: #{tpu_custom_call.1} parent=1 // pred_fallthru
      _
    // Predicated region
    $region22: #{tpu_custom_call.1} parent=1 // pred_check
      _
    $region23: #{tpu_custom_call.1} parent=1 // pred_check_branch
      %67 = sbr.rel (0) target = $region25
    $region24: #{tpu_custom_call.1} parent=1 // pred_region
      %69 = dma.done [#allocation3], 512
    $region25: #{tpu_custom_call.1} parent=1 // pred_fallthru
      _
    // Predicated region
    $region26: #{tpu_custom_call.1} parent=1 // pred_check
      _
    $region27: #{tpu_custom_call.1} parent=1 // pred_check_branch
      %71 = sbr.rel (0) target = $region29
    $region28: #{tpu_custom_call.1} parent=1 // pred_region
      %73 = dma.done [#allocation6], 6144
    $region29: #{tpu_custom_call.1} parent=1 // pred_fallthru
      _
    // Predicated region
    $region30: #{tpu_custom_call.1} parent=1 // pred_check
      _
    $region31: #{tpu_custom_call.1} parent=1 // pred_check_branch
      %75 = sbr.rel (0) target = $region33
    $region32: #{tpu_custom_call.1} parent=1 // pred_region
      %77 = dma.done [#allocation6], 48
    $region33: #{tpu_custom_call.1} parent=1 // pred_fallthru
      _
    // Predicated region
    $region34: #{tpu_custom_call.1} parent=1 // pred_check
      _
    $region35: #{tpu_custom_call.1} parent=1 // pred_check_branch
      %79 = sbr.rel (0) target = $region37
    $region36: #{tpu_custom_call.1} parent=1 // pred_region
      %81 = dma.done [#allocation9], 3072
    $region37: #{tpu_custom_call.1} parent=1 // pred_fallthru
      _
    %v82 = vld [vmem:[#allocation2] sm:$0xf]
    %v83 = vld [vmem:[#allocation2 + $0x4] sm:$0xf]
    %v84 = vld [vmem:[#allocation2 + $0x8] sm:$0xf]
    %v85 = vld [vmem:[#allocation2 + $0xc] sm:$0xf]
    %v86 = vld [vmem:[#allocation2 + $0x10] sm:$0xf]
    %v87 = vld [vmem:[#allocation2 + $0x14] sm:$0xf]
    %v88 = vld [vmem:[#allocation2 + $0x18] sm:$0xf]
    %v89 = vld [vmem:[#allocation2 + $0x1c] sm:$0xf]
    %v90 = vld [vmem:[#allocation5] sm:$0xff]
    %v91 = vld [vmem:[#allocation5 + $0x8] sm:$0xff]
    %v92 = vld [vmem:[#allocation5 + $0x10] sm:$0xff]
    %v93 = vld [vmem:[#allocation5 + $0x18] sm:$0xff]
    %v94 = vld [vmem:[#allocation5 + $0x20] sm:$0xff]
    %v95 = vld [vmem:[#allocation5 + $0x28] sm:$0xff]
    %v96 = vld [vmem:[#allocation5 + $0x30] sm:$0xff]
    %v97 = vld [vmem:[#allocation5 + $0x38] sm:$0xff]
    %v98 = vld [vmem:[#allocation5 + $0x40] sm:$0xff]
    %v99 = vld [vmem:[#allocation5 + $0x48] sm:$0xff]
    %v100 = vld [vmem:[#allocation5 + $0x50] sm:$0xff]
    %v101 = vld [vmem:[#allocation5 + $0x58] sm:$0xff]
    %v102 = vld [vmem:[#allocation5 + $0x60] sm:$0xff]
    %v103 = vld [vmem:[#allocation5 + $0x68] sm:$0xff]
    %v104 = vld [vmem:[#allocation5 + $0x70] sm:$0xff]
    %v105 = vld [vmem:[#allocation5 + $0x78] sm:$0xff]
    %v106 = vld [vmem:[#allocation5 + $0x80] sm:$0xff]
    %v107 = vld [vmem:[#allocation5 + $0x88] sm:$0xff]
    %v108 = vld [vmem:[#allocation5 + $0x90] sm:$0xff]
    %v109 = vld [vmem:[#allocation5 + $0x98] sm:$0xff]
    %v110 = vld [vmem:[#allocation5 + $0xa0] sm:$0xff]
    %v111 = vld [vmem:[#allocation5 + $0xa8] sm:$0xff]
    %v112 = vld [vmem:[#allocation5 + $0xb0] sm:$0xff]
    %v113 = vld [vmem:[#allocation5 + $0xb8] sm:$0xff]
    %v114 = vld [vmem:[#allocation5 + $0xc0] sm:$0xff]
    %v115 = vld [vmem:[#allocation5 + $0xc8] sm:$0xff]
    %v116 = vld [vmem:[#allocation5 + $0xd0] sm:$0xff]
    %v117 = vld [vmem:[#allocation5 + $0xd8] sm:$0xff]
    %v118 = vld [vmem:[#allocation5 + $0xe0] sm:$0xff]
    %v119 = vld [vmem:[#allocation5 + $0xe8] sm:$0xff]
    %v120 = vld [vmem:[#allocation5 + $0xf0] sm:$0xff]
    %v121 = vld [vmem:[#allocation5 + $0xf8] sm:$0xff]
    %v122 = vld [vmem:[#allocation5 + $0x100] sm:$0xff]
    %v123 = vld [vmem:[#allocation5 + $0x108] sm:$0xff]
    %v124 = vld [vmem:[#allocation5 + $0x110] sm:$0xff]
    %v125 = vld [vmem:[#allocation5 + $0x118] sm:$0xff]
    %v126 = vld [vmem:[#allocation5 + $0x120] sm:$0xff]
    %v127 = vld [vmem:[#allocation5 + $0x128] sm:$0xff]
    %v128 = vld [vmem:[#allocation5 + $0x130] sm:$0xff]
    %v129 = vld [vmem:[#allocation5 + $0x138] sm:$0xff]
    %v130 = vld [vmem:[#allocation5 + $0x140] sm:$0xff]
    %v131 = vld [vmem:[#allocation5 + $0x148] sm:$0xff]
    %v132 = vld [vmem:[#allocation5 + $0x150] sm:$0xff]
    %v133 = vld [vmem:[#allocation5 + $0x158] sm:$0xff]
    %v134 = vld [vmem:[#allocation5 + $0x160] sm:$0xff]
    %v135 = vld [vmem:[#allocation5 + $0x168] sm:$0xff]
    %v136 = vld [vmem:[#allocation5 + $0x170] sm:$0xff]
    %v137 = vld [vmem:[#allocation5 + $0x178] sm:$0xff]
    %v146 = vunpack.c.l.b16 %v82
    %v147 = vunpack.c.l.b16 %v83
    %v148 = vunpack.c.l.b16 %v84
    %v149 = vunpack.c.l.b16 %v85
    %v150 = vunpack.c.l.b16 %v86
    %v151 = vunpack.c.l.b16 %v87
    %v152 = vunpack.c.l.b16 %v88
    %v153 = vunpack.c.l.b16 %v89
    %v154 = vpack.c.b16 %v147, %v146
    %v155 = vpack.c.b16 %v149, %v148
    %v156 = vpack.c.b16 %v151, %v150
    %v157 = vpack.c.b16 %v153, %v152
    %v210 = vunpack.c.l.b16 %v90
    %v211 = vunpack.c.h.b16 %v90
    %v212 = vunpack.c.l.b16 %v91
    %v213 = vunpack.c.h.b16 %v91
    %v214 = vunpack.c.l.b16 %v92
    %v215 = vunpack.c.h.b16 %v92
    %v216 = vunpack.c.l.b16 %v93
    %v217 = vunpack.c.h.b16 %v93
    %v218 = vunpack.c.l.b16 %v94
    %v219 = vunpack.c.h.b16 %v94
    %v220 = vunpack.c.l.b16 %v95
    %v221 = vunpack.c.h.b16 %v95
    %v222 = vunpack.c.l.b16 %v96
    %v223 = vunpack.c.h.b16 %v96
    %v224 = vunpack.c.l.b16 %v97
    %v225 = vunpack.c.h.b16 %v97
    %v226 = vunpack.c.l.b16 %v98
    %v227 = vunpack.c.h.b16 %v98
    %v228 = vunpack.c.l.b16 %v99
    %v229 = vunpack.c.h.b16 %v99
    %v230 = vunpack.c.l.b16 %v100
    %v231 = vunpack.c.h.b16 %v100
    %v232 = vunpack.c.l.b16 %v101
    %v233 = vunpack.c.h.b16 %v101
    %v234 = vunpack.c.l.b16 %v102
    %v235 = vunpack.c.h.b16 %v102
    %v236 = vunpack.c.l.b16 %v103
    %v237 = vunpack.c.h.b16 %v103
    %v238 = vunpack.c.l.b16 %v104
    %v239 = vunpack.c.h.b16 %v104
    %v240 = vunpack.c.l.b16 %v105
    %v241 = vunpack.c.h.b16 %v105
    %v242 = vunpack.c.l.b16 %v106
    %v243 = vunpack.c.h.b16 %v106
    %v244 = vunpack.c.l.b16 %v107
    %v245 = vunpack.c.h.b16 %v107
    %v246 = vunpack.c.l.b16 %v108
    %v247 = vunpack.c.h.b16 %v108
    %v248 = vunpack.c.l.b16 %v109
    %v249 = vunpack.c.h.b16 %v109
    %v250 = vunpack.c.l.b16 %v110
    %v251 = vunpack.c.h.b16 %v110
    %v252 = vunpack.c.l.b16 %v111
    %v253 = vunpack.c.h.b16 %v111
    %v254 = vunpack.c.l.b16 %v112
    %v255 = vunpack.c.h.b16 %v112
    %v256 = vunpack.c.l.b16 %v113
    %v257 = vunpack.c.h.b16 %v113
    %v258 = vunpack.c.l.b16 %v114
    %v259 = vunpack.c.h.b16 %v114
    %v260 = vunpack.c.l.b16 %v115
    %v261 = vunpack.c.h.b16 %v115
    %v262 = vunpack.c.l.b16 %v116
    %v263 = vunpack.c.h.b16 %v116
    %v264 = vunpack.c.l.b16 %v117
    %v265 = vunpack.c.h.b16 %v117
    %v266 = vunpack.c.l.b16 %v118
    %v267 = vunpack.c.h.b16 %v118
    %v268 = vunpack.c.l.b16 %v119
    %v269 = vunpack.c.h.b16 %v119
    %v270 = vunpack.c.l.b16 %v120
    %v271 = vunpack.c.h.b16 %v120
    %v272 = vunpack.c.l.b16 %v121
    %v273 = vunpack.c.h.b16 %v121
    %v274 = vunpack.c.l.b16 %v122
    %v275 = vunpack.c.h.b16 %v122
    %v276 = vunpack.c.l.b16 %v123
    %v277 = vunpack.c.h.b16 %v123
    %v278 = vunpack.c.l.b16 %v124
    %v279 = vunpack.c.h.b16 %v124
    %v280 = vunpack.c.l.b16 %v125
    %v281 = vunpack.c.h.b16 %v125
    %v282 = vunpack.c.l.b16 %v126
    %v283 = vunpack.c.h.b16 %v126
    %v284 = vunpack.c.l.b16 %v127
    %v285 = vunpack.c.h.b16 %v127
    %v286 = vunpack.c.l.b16 %v128
    %v287 = vunpack.c.h.b16 %v128
    %v288 = vunpack.c.l.b16 %v129
    %v289 = vunpack.c.h.b16 %v129
    %v290 = vunpack.c.l.b16 %v130
    %v291 = vunpack.c.h.b16 %v130
    %v292 = vunpack.c.l.b16 %v131
    %v293 = vunpack.c.h.b16 %v131
    %v294 = vunpack.c.l.b16 %v132
    %v295 = vunpack.c.h.b16 %v132
    %v296 = vunpack.c.l.b16 %v133
    %v297 = vunpack.c.h.b16 %v133
    %v298 = vunpack.c.l.b16 %v134
    %v299 = vunpack.c.h.b16 %v134
    %v300 = vunpack.c.l.b16 %v135
    %v301 = vunpack.c.h.b16 %v135
    %v302 = vunpack.c.l.b16 %v136
    %v303 = vunpack.c.h.b16 %v136
    %v304 = vunpack.c.l.b16 %v137
    %v305 = vunpack.c.h.b16 %v137
    %v306 = vpack.c.b16 %v216, %v210
    %v307 = vpack.c.b16 %v217, %v211
    %v308 = vpack.c.b16 %v218, %v212
    %v309 = vpack.c.b16 %v219, %v213
    %v310 = vpack.c.b16 %v220, %v214
    %v311 = vpack.c.b16 %v221, %v215
    %v312 = vpack.c.b16 %v228, %v222
    %v313 = vpack.c.b16 %v229, %v223
    %v314 = vpack.c.b16 %v230, %v224
    %v315 = vpack.c.b16 %v231, %v225
    %v316 = vpack.c.b16 %v232, %v226
    %v317 = vpack.c.b16 %v233, %v227
    %v318 = vpack.c.b16 %v240, %v234
    %v319 = vpack.c.b16 %v241, %v235
    %v320 = vpack.c.b16 %v242, %v236
    %v321 = vpack.c.b16 %v243, %v237
    %v322 = vpack.c.b16 %v244, %v238
    %v323 = vpack.c.b16 %v245, %v239
    %v324 = vpack.c.b16 %v252, %v246
    %v325 = vpack.c.b16 %v253, %v247
    %v326 = vpack.c.b16 %v254, %v248
    %v327 = vpack.c.b16 %v255, %v249
    %v328 = vpack.c.b16 %v256, %v250
    %v329 = vpack.c.b16 %v257, %v251
    %v330 = vpack.c.b16 %v264, %v258
    %v331 = vpack.c.b16 %v265, %v259
    %v332 = vpack.c.b16 %v266, %v260
    %v333 = vpack.c.b16 %v267, %v261
    %v334 = vpack.c.b16 %v268, %v262
    %v335 = vpack.c.b16 %v269, %v263
    %v336 = vpack.c.b16 %v276, %v270
    %v337 = vpack.c.b16 %v277, %v271
    %v338 = vpack.c.b16 %v278, %v272
    %v339 = vpack.c.b16 %v279, %v273
    %v340 = vpack.c.b16 %v280, %v274
    %v341 = vpack.c.b16 %v281, %v275
    %v342 = vpack.c.b16 %v288, %v282
    %v343 = vpack.c.b16 %v289, %v283
    %v344 = vpack.c.b16 %v290, %v284
    %v345 = vpack.c.b16 %v291, %v285
    %v346 = vpack.c.b16 %v292, %v286
    %v347 = vpack.c.b16 %v293, %v287
    %v348 = vpack.c.b16 %v300, %v294
    %v349 = vpack.c.b16 %v301, %v295
    %v350 = vpack.c.b16 %v302, %v296
    %v351 = vpack.c.b16 %v303, %v297
    %v352 = vpack.c.b16 %v304, %v298
    %v353 = vpack.c.b16 %v305, %v299
    %402 = vmatpush.bf16.msra.mxu0 %v348
    %403 = vmatpush.bf16.msra.mxu0 %v342
    %404 = vmatpush.bf16.msra.mxu0 %v336
    %405 = vmatpush.bf16.msra.mxu0 %v330
    %406 = vmatpush.bf16.msra.mxu0 %v324
    %407 = vmatpush.bf16.msra.mxu0 %v318
    %408 = vmatpush.bf16.msra.mxu0 %v312
    %409 = vmatpush.bf16.msra.mxu0 %v306
    %410 = vmatmul.bf16.gmra.mxu0 %v154
    %v411 = vpop.f32.mrf.mxu0
    %v412 = vadd.f32 0.0, %v411
    %v413 = vpop.f32.mrf.mxu0
    %v414 = vadd.f32 0.0, %v413
    %415 = vmatmul.bf16.gmra.mxu0 %v155
    %v416 = vpop.f32.mrf.mxu0
    %v417 = vadd.f32 0.0, %v416
    %v418 = vpop.f32.mrf.mxu0
    %v419 = vadd.f32 0.0, %v418
    %420 = vmatmul.bf16.gmra.mxu0 %v156
    %v421 = vpop.f32.mrf.mxu0
    %v422 = vadd.f32 0.0, %v421
    %v423 = vpop.f32.mrf.mxu0
    %v424 = vadd.f32 0.0, %v423
    %425 = vmatmul.bf16.gmra.mxu0 %v157
    %v426 = vpop.f32.mrf.mxu0
    %v427 = vadd.f32 0.0, %v426
    %v428 = vpop.f32.mrf.mxu0
    %v429 = vadd.f32 0.0, %v428
    %430 = vdwg.mxu0
    %431 = vmatpush.bf16.msra.mxu0 %v349
    %432 = vmatpush.bf16.msra.mxu0 %v343
    %433 = vmatpush.bf16.msra.mxu0 %v337
    %434 = vmatpush.bf16.msra.mxu0 %v331
    %435 = vmatpush.bf16.msra.mxu0 %v325
    %436 = vmatpush.bf16.msra.mxu0 %v319
    %437 = vmatpush.bf16.msra.mxu0 %v313
    %438 = vmatpush.bf16.msra.mxu0 %v307
    %439 = vmatmul.bf16.gmra.mxu0 %v154
    %v440 = vpop.f32.mrf.mxu0
    %v441 = vadd.f32 0.0, %v440
    %v442 = vpop.f32.mrf.mxu0
    %v443 = vadd.f32 0.0, %v442
    %444 = vmatmul.bf16.gmra.mxu0 %v155
    %v445 = vpop.f32.mrf.mxu0
    %v446 = vadd.f32 0.0, %v445
    %v447 = vpop.f32.mrf.mxu0
    %v448 = vadd.f32 0.0, %v447
    %449 = vmatmul.bf16.gmra.mxu0 %v156
    %v450 = vpop.f32.mrf.mxu0
    %v451 = vadd.f32 0.0, %v450
    %v452 = vpop.f32.mrf.mxu0
    %v453 = vadd.f32 0.0, %v452
    %454 = vmatmul.bf16.gmra.mxu0 %v157
    %v455 = vpop.f32.mrf.mxu0
    %v456 = vadd.f32 0.0, %v455
    %v457 = vpop.f32.mrf.mxu0
    %458 = vdwg.mxu0
    %459 = vmatpush.bf16.msra.mxu0 %v350
    %460 = vmatpush.bf16.msra.mxu0 %v344
    %461 = vmatpush.bf16.msra.mxu0 %v338
    %462 = vmatpush.bf16.msra.mxu0 %v332
    %463 = vmatpush.bf16.msra.mxu0 %v326
    %464 = vmatpush.bf16.msra.mxu0 %v320
    %465 = vmatpush.bf16.msra.mxu0 %v314
    %466 = vmatpush.bf16.msra.mxu0 %v308
    %467 = vmatmul.bf16.gmra.mxu0 %v154
    %v468 = vpop.f32.mrf.mxu0
    %v469 = vpop.f32.mrf.mxu0
    %v470 = vadd.f32 0.0, %v469
    %471 = vmatmul.bf16.gmra.mxu0 %v155
    %v472 = vpop.f32.mrf.mxu0
    %v473 = vadd.f32 0.0, %v472
    %v474 = vpop.f32.mrf.mxu0
    %v475 = vadd.f32 0.0, %v474
    %476 = vmatmul.bf16.gmra.mxu0 %v156
    %v477 = vpop.f32.mrf.mxu0
    %v478 = vadd.f32 0.0, %v477
    %v479 = vpop.f32.mrf.mxu0
    %v480 = vadd.f32 0.0, %v479
    %481 = vmatmul.bf16.gmra.mxu0 %v157
    %v482 = vpop.f32.mrf.mxu0
    %v483 = vadd.f32 0.0, %v482
    %v484 = vpop.f32.mrf.mxu0
    %v485 = vadd.f32 0.0, %v484
    %486 = vdwg.mxu0
    %487 = vmatpush.bf16.msra.mxu0 %v351
    %488 = vmatpush.bf16.msra.mxu0 %v345
    %489 = vmatpush.bf16.msra.mxu0 %v339
    %490 = vmatpush.bf16.msra.mxu0 %v333
    %491 = vmatpush.bf16.msra.mxu0 %v327
    %492 = vmatpush.bf16.msra.mxu0 %v321
    %493 = vmatpush.bf16.msra.mxu0 %v315
    %494 = vmatpush.bf16.msra.mxu0 %v309
    %495 = vmatmul.bf16.gmra.mxu0 %v154
    %v496 = vpop.f32.mrf.mxu0
    %v497 = vadd.f32 0.0, %v496
    %v498 = vpop.f32.mrf.mxu0
    %v499 = vadd.f32 0.0, %v498
    %500 = vmatmul.bf16.gmra.mxu0 %v155
    %v501 = vpop.f32.mrf.mxu0
    %v502 = vadd.f32 0.0, %v501
    %v503 = vpop.f32.mrf.mxu0
    %v504 = vadd.f32 0.0, %v503
    %505 = vmatmul.bf16.gmra.mxu0 %v156
    %v506 = vpop.f32.mrf.mxu0
    %v507 = vadd.f32 0.0, %v506
    %v508 = vpop.f32.mrf.mxu0
    %v509 = vadd.f32 0.0, %v508
    %510 = vmatmul.bf16.gmra.mxu0 %v157
    %v511 = vpop.f32.mrf.mxu0
    %v512 = vpop.f32.mrf.mxu0
    %513 = vdwg.mxu0
    %514 = vmatpush.bf16.msra.mxu0 %v352
    %515 = vmatpush.bf16.msra.mxu0 %v346
    %516 = vmatpush.bf16.msra.mxu0 %v340
    %517 = vmatpush.bf16.msra.mxu0 %v334
    %518 = vmatpush.bf16.msra.mxu0 %v328
    %519 = vmatpush.bf16.msra.mxu0 %v322
    %520 = vmatpush.bf16.msra.mxu0 %v316
    %521 = vmatpush.bf16.msra.mxu0 %v310
    %522 = vmatmul.bf16.gmra.mxu0 %v154
    %v523 = vpop.f32.mrf.mxu0
    %v524 = vpop.f32.mrf.mxu0
    %v525 = vadd.f32 0.0, %v524
    %526 = vmatmul.bf16.gmra.mxu0 %v155
    %v527 = vpop.f32.mrf.mxu0
    %v528 = vadd.f32 0.0, %v527
    %v529 = vpop.f32.mrf.mxu0
    %v530 = vadd.f32 0.0, %v529
    %531 = vmatmul.bf16.gmra.mxu0 %v156
    %v532 = vpop.f32.mrf.mxu0
    %v533 = vadd.f32 0.0, %v532
    %v534 = vpop.f32.mrf.mxu0
    %v535 = vadd.f32 0.0, %v534
    %536 = vmatmul.bf16.gmra.mxu0 %v157
    %v537 = vpop.f32.mrf.mxu0
    %v538 = vadd.f32 0.0, %v537
    %v539 = vpop.f32.mrf.mxu0
    %540 = vdwg.mxu0
    %541 = vmatpush.bf16.msra.mxu0 %v353
    %542 = vmatpush.bf16.msra.mxu0 %v347
    %543 = vmatpush.bf16.msra.mxu0 %v341
    %544 = vmatpush.bf16.msra.mxu0 %v335
    %545 = vmatpush.bf16.msra.mxu0 %v329
    %546 = vmatpush.bf16.msra.mxu0 %v323
    %547 = vmatpush.bf16.msra.mxu0 %v317
    %548 = vmatpush.bf16.msra.mxu0 %v311
    %549 = vmatmul.bf16.gmra.mxu0 %v154
    %v550 = vpop.f32.mrf.mxu0
    %v551 = vpop.f32.mrf.mxu0
    %552 = vmatmul.bf16.gmra.mxu0 %v155
    %v553 = vpop.f32.mrf.mxu0
    %v554 = vadd.f32 0.0, %v553
    %v555 = vpop.f32.mrf.mxu0
    %v556 = vadd.f32 0.0, %v555
    %557 = vmatmul.bf16.gmra.mxu0 %v156
    %v558 = vpop.f32.mrf.mxu0
    %v559 = vadd.f32 0.0, %v558
    %v560 = vpop.f32.mrf.mxu0
    %v561 = vadd.f32 0.0, %v560
    %562 = vmatmul.bf16.gmra.mxu0 %v157
    %v563 = vpop.f32.mrf.mxu0
    %v564 = vadd.f32 0.0, %v563
    %v565 = vpop.f32.mrf.mxu0
    %v566 = vadd.f32 0.0, %v565
    %567 = vdwg.mxu0
    %v568 = vld [vmem:[#allocation7] sm:$0x1]
    %v570 = vperm.slane %v568, 0
    %v572 = vadd.f32 %v412, %v570
    %v573 = vadd.f32 %v414, %v570
    %v574 = vadd.f32 %v417, %v570
    %v575 = vadd.f32 %v419, %v570
    %v576 = vadd.f32 %v422, %v570
    %v577 = vadd.f32 %v424, %v570
    %v578 = vadd.f32 %v427, %v570
    %v579 = vadd.f32 %v429, %v570
    %v580 = vmax.f32 %v572, 0.0
    %v581 = vmax.f32 %v573, 0.0
    %v582 = vmax.f32 %v574, 0.0
    %v583 = vmax.f32 %v575, 0.0
    %v584 = vmax.f32 %v576, 0.0
    %v585 = vmax.f32 %v577, 0.0
    %v586 = vmax.f32 %v578, 0.0
    %v587 = vmax.f32 %v579, 0.0
    %v588 = vadd.f32 %v580, %v581
    %v589 = vadd.f32 %v588, %v582
    %v590 = vadd.f32 %v589, %v583
    %v591 = vadd.f32 %v590, %v584
    %v592 = vadd.f32 %v591, %v585
    %v593 = vadd.f32 %v592, %v586
    %v594 = vadd.f32 %v593, %v587
    %v595 = vmul.f32 %v594, 0.125
    %v596 = vpack.c.bf16 %v595, %v595
    %v597 = vld [vmem:[#allocation8] sm:$0xf]
    %v598 = vld [vmem:[#allocation8 + $0x4] sm:$0xf]
    %v599 = vld [vmem:[#allocation8 + $0x8] sm:$0xf]
    %v600 = vld [vmem:[#allocation8 + $0xc] sm:$0xf]
    %v601 = vld [vmem:[#allocation8 + $0x10] sm:$0xf]
    %v602 = vld [vmem:[#allocation8 + $0x14] sm:$0xf]
    %v603 = vld [vmem:[#allocation8 + $0x18] sm:$0xf]
    %v604 = vld [vmem:[#allocation8 + $0x1c] sm:$0xf]
    %v605 = vld [vmem:[#allocation8 + $0x20] sm:$0xf]
    %v606 = vld [vmem:[#allocation8 + $0x24] sm:$0xf]
    %v607 = vld [vmem:[#allocation8 + $0x28] sm:$0xf]
    %v608 = vld [vmem:[#allocation8 + $0x2c] sm:$0xf]
    %v609 = vld [vmem:[#allocation8 + $0x30] sm:$0xf]
    %v610 = vld [vmem:[#allocation8 + $0x34] sm:$0xf]
    %v611 = vld [vmem:[#allocation8 + $0x38] sm:$0xf]
    %v612 = vld [vmem:[#allocation8 + $0x3c] sm:$0xf]
    %v613 = vadd.f32 %v441, %v470
    %v614 = vadd.f32 %v443, %v473
    %v615 = vadd.f32 %v446, %v475
    %v616 = vadd.f32 %v448, %v478
    %v617 = vadd.f32 %v451, %v480
    %v618 = vadd.f32 %v453, %v483
    %v619 = vadd.f32 %v456, %v485
    %v620 = vld [vmem:[#allocation7 + $0x1] sm:$0x1]
    %v622 = vperm.slane %v620, 0
    %v624 = vadd.f32 %v613, %v622
    %v625 = vadd.f32 %v614, %v622
    %v626 = vadd.f32 %v615, %v622
    %v627 = vadd.f32 %v616, %v622
    %v628 = vadd.f32 %v617, %v622
    %v629 = vadd.f32 %v618, %v622
    %v630 = vadd.f32 %v619, %v622
    %v631 = vmax.f32 %v624, 0.0
    %v632 = vmax.f32 %v625, 0.0
    %v633 = vmax.f32 %v626, 0.0
    %v634 = vmax.f32 %v627, 0.0
    %v635 = vmax.f32 %v628, 0.0
    %v636 = vmax.f32 %v629, 0.0
    %v637 = vmax.f32 %v630, 0.0
    %v638 = vadd.f32 %v631, %v632
    %v639 = vadd.f32 %v638, %v633
    %v640 = vadd.f32 %v639, %v634
    %v641 = vadd.f32 %v640, %v635
    %v642 = vadd.f32 %v641, %v636
    %v643 = vadd.f32 %v642, %v637
    %v644 = vmul.f32 %v643, 0.14285715
    %v645 = vpack.c.bf16 %v644, %v644
    %s646 = scalar_lea.vmem [#allocation8], 64
    %v647 = vld [vmem:[%s646] sm:$0xf]
    %v648 = vld [vmem:[%s646 + $0x4] sm:$0xf]
    %v649 = vld [vmem:[%s646 + $0x8] sm:$0xf]
    %v650 = vld [vmem:[%s646 + $0xc] sm:$0xf]
    %v651 = vld [vmem:[%s646 + $0x10] sm:$0xf]
    %v652 = vld [vmem:[%s646 + $0x14] sm:$0xf]
    %v653 = vld [vmem:[%s646 + $0x18] sm:$0xf]
    %v654 = vld [vmem:[%s646 + $0x1c] sm:$0xf]
    %v655 = vld [vmem:[%s646 + $0x20] sm:$0xf]
    %v656 = vld [vmem:[%s646 + $0x24] sm:$0xf]
    %v657 = vld [vmem:[%s646 + $0x28] sm:$0xf]
    %v658 = vld [vmem:[%s646 + $0x2c] sm:$0xf]
    %v659 = vld [vmem:[%s646 + $0x30] sm:$0xf]
    %v660 = vld [vmem:[%s646 + $0x34] sm:$0xf]
    %v661 = vld [vmem:[%s646 + $0x38] sm:$0xf]
    %v662 = vld [vmem:[%s646 + $0x3c] sm:$0xf]
    %v679 = vunpack.c.l.b16 %v647
    %v680 = vunpack.c.l.b16 %v648
    %v681 = vunpack.c.l.b16 %v649
    %v682 = vunpack.c.l.b16 %v650
    %v683 = vunpack.c.l.b16 %v651
    %v684 = vunpack.c.l.b16 %v652
    %v685 = vunpack.c.l.b16 %v653
    %v686 = vunpack.c.l.b16 %v654
    %v687 = vunpack.c.l.b16 %v655
    %v688 = vunpack.c.l.b16 %v656
    %v689 = vunpack.c.l.b16 %v657
    %v690 = vunpack.c.l.b16 %v658
    %v691 = vunpack.c.l.b16 %v659
    %v692 = vunpack.c.l.b16 %v660
    %v693 = vunpack.c.l.b16 %v661
    %v694 = vunpack.c.l.b16 %v662
    %v695 = vpack.c.b16 %v680, %v679
    %v696 = vpack.c.b16 %v682, %v681
    %v697 = vpack.c.b16 %v684, %v683
    %v698 = vpack.c.b16 %v686, %v685
    %v699 = vpack.c.b16 %v688, %v687
    %v700 = vpack.c.b16 %v690, %v689
    %v701 = vpack.c.b16 %v692, %v691
    %v702 = vpack.c.b16 %v694, %v693
    %711 = vmatpush.bf16.msra.mxu0 %v702
    %712 = vmatpush.bf16.msra.mxu0 %v701
    %713 = vmatpush.bf16.msra.mxu0 %v700
    %714 = vmatpush.bf16.msra.mxu0 %v699
    %715 = vmatpush.bf16.msra.mxu0 %v698
    %716 = vmatpush.bf16.msra.mxu0 %v697
    %717 = vmatpush.bf16.msra.mxu0 %v696
    %718 = vmatpush.bf16.msra.mxu0 %v695
    %719 = vmatmul.bf16.gmra.mxu0 %v645
    %v720 = vpop.f32.mrf.mxu0
    %v721 = vadd.f32 0.0, %v720
    %v722 = vpop.f32.mrf.mxu0
    %723 = vdwg.mxu0
    %v740 = vunpack.c.l.b16 %v597
    %v741 = vunpack.c.l.b16 %v598
    %v742 = vunpack.c.l.b16 %v599
    %v743 = vunpack.c.l.b16 %v600
    %v744 = vunpack.c.l.b16 %v601
    %v745 = vunpack.c.l.b16 %v602
    %v746 = vunpack.c.l.b16 %v603
    %v747 = vunpack.c.l.b16 %v604
    %v748 = vunpack.c.l.b16 %v605
    %v749 = vunpack.c.l.b16 %v606
    %v750 = vunpack.c.l.b16 %v607
    %v751 = vunpack.c.l.b16 %v608
    %v752 = vunpack.c.l.b16 %v609
    %v753 = vunpack.c.l.b16 %v610
    %v754 = vunpack.c.l.b16 %v611
    %v755 = vunpack.c.l.b16 %v612
    %v756 = vpack.c.b16 %v741, %v740
    %v757 = vpack.c.b16 %v743, %v742
    %v758 = vpack.c.b16 %v745, %v744
    %v759 = vpack.c.b16 %v747, %v746
    %v760 = vpack.c.b16 %v749, %v748
    %v761 = vpack.c.b16 %v751, %v750
    %v762 = vpack.c.b16 %v753, %v752
    %v763 = vpack.c.b16 %v755, %v754
    %772 = vmatpush.bf16.msra.mxu0 %v763
    %773 = vmatpush.bf16.msra.mxu0 %v762
    %774 = vmatpush.bf16.msra.mxu0 %v761
    %775 = vmatpush.bf16.msra.mxu0 %v760
    %776 = vmatpush.bf16.msra.mxu0 %v759
    %777 = vmatpush.bf16.msra.mxu0 %v758
    %778 = vmatpush.bf16.msra.mxu0 %v757
    %779 = vmatpush.bf16.msra.mxu0 %v756
    %780 = vmatmul.bf16.gmra.mxu0 %v596
    %v781 = vpop.f32.mrf.mxu0
    %v782 = vadd.f32 %v721, %v781
    %v783 = vpop.f32.mrf.mxu0
    %784 = vdwg.mxu0
    %v785 = vadd.f32 %v497, %v525
    %v786 = vadd.f32 %v499, %v528
    %v787 = vadd.f32 %v502, %v530
    %v788 = vadd.f32 %v504, %v533
    %v789 = vadd.f32 %v507, %v535
    %v790 = vadd.f32 %v509, %v538
    %v791 = vadd.f32 %v785, %v554
    %v792 = vadd.f32 %v786, %v556
    %v793 = vadd.f32 %v787, %v559
    %v794 = vadd.f32 %v788, %v561
    %v795 = vadd.f32 %v789, %v564
    %v796 = vadd.f32 %v790, %v566
    %v797 = vld [vmem:[#allocation7 + $0x2] sm:$0x1]
    %v799 = vperm.slane %v797, 0
    %v801 = vadd.f32 %v791, %v799
    %v802 = vadd.f32 %v792, %v799
    %v803 = vadd.f32 %v793, %v799
    %v804 = vadd.f32 %v794, %v799
    %v805 = vadd.f32 %v795, %v799
    %v806 = vadd.f32 %v796, %v799
    %v807 = vmax.f32 %v801, 0.0
    %v808 = vmax.f32 %v802, 0.0
    %v809 = vmax.f32 %v803, 0.0
    %v810 = vmax.f32 %v804, 0.0
    %v811 = vmax.f32 %v805, 0.0
    %v812 = vmax.f32 %v806, 0.0
    %v813 = vadd.f32 %v807, %v808
    %v814 = vadd.f32 %v813, %v809
    %v815 = vadd.f32 %v814, %v810
    %v816 = vadd.f32 %v815, %v811
    %v817 = vadd.f32 %v816, %v812
    %v818 = vmul.f32 %v817, 0.16666667
    %v819 = vpack.c.bf16 %v818, %v818
    %s820 = scalar_lea.vmem [#allocation8], 128
    %v821 = vld [vmem:[%s820] sm:$0xf]
    %v822 = vld [vmem:[%s820 + $0x4] sm:$0xf]
    %v823 = vld [vmem:[%s820 + $0x8] sm:$0xf]
    %v824 = vld [vmem:[%s820 + $0xc] sm:$0xf]
    %v825 = vld [vmem:[%s820 + $0x10] sm:$0xf]
    %v826 = vld [vmem:[%s820 + $0x14] sm:$0xf]
    %v827 = vld [vmem:[%s820 + $0x18] sm:$0xf]
    %v828 = vld [vmem:[%s820 + $0x1c] sm:$0xf]
    %v829 = vld [vmem:[%s820 + $0x20] sm:$0xf]
    %v830 = vld [vmem:[%s820 + $0x24] sm:$0xf]
    %v831 = vld [vmem:[%s820 + $0x28] sm:$0xf]
    %v832 = vld [vmem:[%s820 + $0x2c] sm:$0xf]
    %v833 = vld [vmem:[%s820 + $0x30] sm:$0xf]
    %v834 = vld [vmem:[%s820 + $0x34] sm:$0xf]
    %v835 = vld [vmem:[%s820 + $0x38] sm:$0xf]
    %v836 = vld [vmem:[%s820 + $0x3c] sm:$0xf]
    %v853 = vunpack.c.l.b16 %v821
    %v854 = vunpack.c.l.b16 %v822
    %v855 = vunpack.c.l.b16 %v823
    %v856 = vunpack.c.l.b16 %v824
    %v857 = vunpack.c.l.b16 %v825
    %v858 = vunpack.c.l.b16 %v826
    %v859 = vunpack.c.l.b16 %v827
    %v860 = vunpack.c.l.b16 %v828
    %v861 = vunpack.c.l.b16 %v829
    %v862 = vunpack.c.l.b16 %v830
    %v863 = vunpack.c.l.b16 %v831
    %v864 = vunpack.c.l.b16 %v832
    %v865 = vunpack.c.l.b16 %v833
    %v866 = vunpack.c.l.b16 %v834
    %v867 = vunpack.c.l.b16 %v835
    %v868 = vunpack.c.l.b16 %v836
    %v869 = vpack.c.b16 %v854, %v853
    %v870 = vpack.c.b16 %v856, %v855
    %v871 = vpack.c.b16 %v858, %v857
    %v872 = vpack.c.b16 %v860, %v859
    %v873 = vpack.c.b16 %v862, %v861
    %v874 = vpack.c.b16 %v864, %v863
    %v875 = vpack.c.b16 %v866, %v865
    %v876 = vpack.c.b16 %v868, %v867
    %885 = vmatpush.bf16.msra.mxu0 %v876
    %886 = vmatpush.bf16.msra.mxu0 %v875
    %887 = vmatpush.bf16.msra.mxu0 %v874
    %888 = vmatpush.bf16.msra.mxu0 %v873
    %889 = vmatpush.bf16.msra.mxu0 %v872
    %890 = vmatpush.bf16.msra.mxu0 %v871
    %891 = vmatpush.bf16.msra.mxu0 %v870
    %892 = vmatpush.bf16.msra.mxu0 %v869
    %893 = vmatmul.bf16.gmra.mxu0 %v819
    %v894 = vpop.f32.mrf.mxu0
    %v895 = vadd.f32 0.0, %v894
    %v896 = vpop.f32.mrf.mxu0
    %897 = vdwg.mxu0
    %v898 = vadd.f32 %v782, %v895
    %v899 = vld [vmem:[%s4] sm:$0x1]
    %v901 = vperm.slane %v899, 0
    %v903 = vadd.f32 %v898, %v901
    %904 = vst [vmem:[#allocation10] sm:$0xff] %v903
    // Predicated region
    $region38: #{tpu_custom_call.1} parent=1 // pred_check
      _
    $region39: #{tpu_custom_call.1} parent=1 // pred_check_branch
      %906 = sbr.rel (0) target = $region41
    $region40: #{tpu_custom_call.1} parent=1 // pred_region
      %908 = vsyncadd [#allocation4], 0
      %s910 = sshll.u32 [#allocation10], 4
      %s911 = int_to_ptr.vmem [resolvable:$true] %s910
      %s912 = sshll.u32 %s5, 4
      %s913 = int_to_ptr.hbm [resolvable:$true] %s912
      %915 = dma.vmem_to_hbm [thread:$0]  %s911, 128, %s913, [#allocation4]
    $region41: #{tpu_custom_call.1} parent=1 // pred_fallthru
      _
    // Predicated region
    $region42: #{tpu_custom_call.1} parent=1 // pred_check
      _
    $region43: #{tpu_custom_call.1} parent=1 // pred_check_branch
      %917 = sbr.rel (0) target = $region45
    $region44: #{tpu_custom_call.1} parent=1 // pred_region
      %919 = dma.done [#allocation4], 128
    $region45: #{tpu_custom_call.1} parent=1 // pred_fallthru
      _
    %920 = vsyncpa [#allocation3], 1
    %921 = vsyncpa [#allocation6], 1
    %922 = vsyncpa [#allocation9], 1
    %923 = vsyncpa [#allocation4], 1

</llo_original>
